<compile_context>
chip_gen: v7x
topology: tpu7x:2x2x1
jax: 0.10.0
libtpu: 0.0.40
codegen_flags: <defaults>
</compile_context>

<pallas_src>
import functools

import jax
import jax.numpy as jnp
from jax import lax
from jax.experimental import pallas as pl
from jax.experimental.pallas import tpu as pltpu

_TILE_CAP = 512                      # max flattened rows per grid step
_MIN_TILE = 8                        # sublane alignment for the row axis
_VMEM_MARGIN = 2 * 1024 * 1024       # slack for compiler-internal scratch
_VMEM_LIMIT_FLOOR = 16 * 1024 * 1024 # never request less than the v5e default


def _round_up(x: int, m: int) -> int:
    return -(-x // m) * m


def _round_down(x: int, m: int) -> int:
    return (x // m) * m


def _vmem_budget_bytes() -> int:
    """Conservative per-core VMEM budget (75% of physical capacity)."""
    try:
        cap = int(pltpu.get_tpu_info().vmem_capacity_bytes)
    except Exception:
        cap = 64 * 1024 * 1024       # v7x physical size: safe lower bound
    return (cap * 3) // 4


# --------------------------------------------------------------------------
# Resident-table kernels (small / medium vocab): full table lives in VMEM.
# --------------------------------------------------------------------------

def _embed_kernel_take(tok_ref, param_ref, out_ref):
    """Vectorized row gather: out[t, :] = param[tok[t], :]."""
    # tok_ref   : VMEM (tile, 1)           int32 (pre-clipped)
    # param_ref : VMEM (n_vocab, d_model)  resident table
    # out_ref   : VMEM (tile, d_model)
    idx = tok_ref[...][:, 0]                                   # (tile,)
    out_ref[...] = jnp.take(param_ref[...], idx, axis=0)


def _embed_kernel_onehot(tok_ref, param_ref, out_ref):
    """Exact one-hot MXU gather, chunked to bound vreg pressure."""
    n_vocab = param_ref.shape[0]
    tile = out_ref.shape[0]
    param = param_ref[...]

    def do_chunk(row0, rows):
        tok = tok_ref[pl.ds(row0, rows), :]                    # (rows, 1) sublane-major
        iota = lax.broadcasted_iota(jnp.int32, (rows, n_vocab), 1)
        onehot = (tok == iota).astype(param.dtype)             # (rows, n_vocab)
        # precision=HIGHEST keeps the f32 matmul exact: 1.0*row + 0.0*rest.
        out_ref[pl.ds(row0, rows), :] = jnp.dot(
            onehot, param,
            preferred_element_type=out_ref.dtype,
            precision=lax.Precision.HIGHEST)

    chunk = 128                                                # <=128 rows per MXU call
    if tile <= chunk:
        do_chunk(0, tile)
    else:
        n_full, rem = divmod(tile, chunk)

        def body(c, carry):
            do_chunk(pl.multiple_of(c * chunk, chunk), chunk)
            return carry

        lax.fori_loop(0, n_full, body, 0, unroll=True)
        if rem:
            do_chunk(n_full * chunk, rem)


def _pallas_embed_resident(tok2d, param, *, tile, mode, single_buffer_param,
                           vmem_limit):
    """tok2d: (padded_rows, 1) int32 -> (padded_rows, d_model)."""
    padded_rows = tok2d.shape[0]
    n_vocab, d_model = param.shape
    num_tiles = padded_rows // tile

    if single_buffer_param:
        # Constant index_map -> table copied once and revisited; Buffered(1)
        # drops the second (never used) pipeline buffer, halving VMEM cost.
        param_spec = pl.BlockSpec((n_vocab, d_model), lambda i: (0, 0),
                                  pipeline_mode=pl.Buffered(1))
    else:
        param_spec = pl.BlockSpec((n_vocab, d_model), lambda i: (0, 0))

    grid_spec = pltpu.PrefetchScalarGridSpec(
        num_scalar_prefetch=0,
        grid=(num_tiles,),
        in_specs=[
            # Token ids as a sublane-major (tile, 1) block.
            pl.BlockSpec((tile, 1), lambda i: (i, 0)),
            param_spec,
        ],
        out_specs=pl.BlockSpec((tile, d_model), lambda i: (i, 0)),
    )

    kernel = _embed_kernel_take if mode == "take" else _embed_kernel_onehot
    return pl.pallas_call(
        kernel,
        grid_spec=grid_spec,
        out_shape=jax.ShapeDtypeStruct((padded_rows, d_model), param.dtype),
        compiler_params=pltpu.CompilerParams(
            # Row tiles are independent -> shard across v7x's two TensorCores.
            dimension_semantics=("parallel",),
            vmem_limit_bytes=int(vmem_limit),
        ),
    )(tok2d, param)


@functools.lru_cache(maxsize=None)
def _resolve_resident_config(padded_rows, tile, n_vocab, d_model, dtype_name,
                             vmem_limit):
    """Pick (mode, single_buffer_param) once per config via a compile probe."""
    tok_sds = jax.ShapeDtypeStruct((padded_rows, 1), jnp.int32)
    par_sds = jax.ShapeDtypeStruct((n_vocab, d_model), jnp.dtype(dtype_name))
    candidates = (("take", True), ("take", False),
                  ("onehot", True), ("onehot", False))
    for mode, single in candidates:
        try:
            fn = functools.partial(
                _pallas_embed_resident, tile=tile, mode=mode,
                single_buffer_param=single, vmem_limit=vmem_limit)
            jax.jit(fn).lower(tok_sds, par_sds).compile()
            return mode, single
        except Exception:
            continue
    return candidates[-1]   # let the real call surface the error loudly


# --------------------------------------------------------------------------
# Large-table path: scalar-prefetched token ids drive a per-row HBM gather.
# --------------------------------------------------------------------------

def _rowgather_kernel(tok_smem_ref, param_row_ref, out_ref):
    del tok_smem_ref                 # only consumed by the index_maps
    out_ref[...] = param_row_ref[...]


def _pallas_embed_rowgather(tok1d, param):
    """tok1d: (total,) int32 (pre-clipped) -> (total, d_model)."""
    total = tok1d.shape[0]
    n_vocab, d_model = param.shape
    grid_spec = pltpu.PrefetchScalarGridSpec(
        num_scalar_prefetch=1,
        grid=(total,),
        in_specs=[
            # Row index of the table block comes from the prefetched token id.
            pl.BlockSpec((1, d_model), lambda i, tok: (tok[i], 0)),
        ],
        out_specs=pl.BlockSpec((1, d_model), lambda i, tok: (i, 0)),
    )
    return pl.pallas_call(
        _rowgather_kernel,
        grid_spec=grid_spec,
        out_shape=jax.ShapeDtypeStruct((total, d_model), param.dtype),
        compiler_params=pltpu.CompilerParams(
            dimension_semantics=("arbitrary",),
        ),
    )(tok1d, param)


# --------------------------------------------------------------------------
# Wrapper (jit-able): Pallas equivalent of Embedder.forward = param[tokens].
# --------------------------------------------------------------------------

def embedder_forward(tokens: jax.Array, param: jax.Array) -> jax.Array:
    n_batch, n_tokens = tokens.shape
    n_vocab, d_model = param.shape
    total = n_batch * n_tokens
    itemsize = jnp.dtype(param.dtype).itemsize

    # Clamp ids once on the wrapper side (device refs have no OOB check).
    # Note: PyTorch would raise on out-of-range ids; we clamp instead.
    tok_flat = jnp.clip(tokens.reshape(-1).astype(jnp.int32), 0, n_vocab - 1)

    budget = _vmem_budget_bytes()
    table_bytes = n_vocab * d_model * itemsize
    # Budget the table double-buffered (worst case); the probe may single-buffer.
    resident_fixed = 2 * table_bytes + _VMEM_MARGIN
    per_row = 2 * (d_model * itemsize + 4)   # double-buffered out slab + token ids

    if resident_fixed + _MIN_TILE * per_row <= budget:
        # ---- small / medium table: keep it resident in VMEM ----
        tile_cap = min(_TILE_CAP,
                       _round_down((budget - resident_fixed) // per_row, _MIN_TILE))
        # Guarantee >=2 grid tiles when the row count permits (v7x megacore).
        tile = min(tile_cap, max(_MIN_TILE, _round_up(pl.cdiv(total, 2), _MIN_TILE)))
        padded_rows = _round_up(total, tile)

        tok2d = tok_flat
        if padded_rows != total:
            tok2d = jnp.pad(tok2d, (0, padded_rows - total))   # padded rows -> id 0
        tok2d = tok2d.reshape(padded_rows, 1)

        vmem_limit = max(_VMEM_LIMIT_FLOOR, resident_fixed + tile * per_row)
        mode, single = _resolve_resident_config(
            padded_rows, tile, n_vocab, d_model,
            jnp.dtype(param.dtype).name, int(vmem_limit))
        out_flat = _pallas_embed_resident(
            tok2d, param, tile=tile, mode=mode,
            single_buffer_param=single, vmem_limit=vmem_limit)
        out_flat = out_flat[:total]
    else:
        # ---- large table (does not fit the VMEM budget): per-row HBM gather ----
        out_flat = _pallas_embed_rowgather(tok_flat, param)

    return out_flat.reshape(n_batch, n_tokens, d_model)


if __name__ == "__main__":
    n_vocab, d_model = 64, 128
    n_batch, n_tokens = 2, 8

    key = jax.random.PRNGKey(0)
    k_param, k_tok = jax.random.split(key)

    # torch.nn.init.normal_(param) -> standard normal, float32
    param = jax.random.normal(k_param, (n_vocab, d_model), dtype=jnp.float32)
    tokens = jax.random.randint(k_tok, (n_batch, n_tokens), 0, n_vocab,
                                dtype=jnp.int32)

    fwd = jax.jit(embedder_forward)
    out = jax.block_until_ready(fwd(tokens, param))

    ref = jnp.take(param, tokens, axis=0)     # pure-JAX reference of param[tokens]
    assert out.shape == (n_batch, n_tokens, d_model)
    assert out.dtype == jnp.float32
    assert jnp.allclose(out, ref, rtol=1e-6, atol=1e-6), (
        "Pallas embedding gather mismatch vs reference")

    print("KERNEL_OK")
</pallas_src>

<mosaic_0001>
module attributes {stable_mosaic.version = 11 : i64} {
  func.func @_embed_kernel_onehot(%arg0: i32, %arg1: memref<8x1xi32, #tpu.memory_space<vmem>>, %arg2: memref<64x128xf32, #tpu.memory_space<vmem>>, %arg3: memref<8x128xf32, #tpu.memory_space<vmem>>) attributes {dimension_semantics = [#tpu.dimension_semantics<parallel>], iteration_bounds = array<i64: 2>, scalar_prefetch = 0 : i64, scratch_operands = 0 : i64, tpu.core_type = #tpu.core_type<tc>, window_params = [{transform_indices = @transform_0, window_bounds = array<i64: 8, 1>}, {pipeline_mode = #tpu.pipeline_mode<synchronous>, transform_indices = @transform_1, window_bounds = array<i64: 64, 128>}, {transform_indices = @transform_2, window_bounds = array<i64: 8, 128>}]} {
    %c0 = arith.constant 0 : index
    %c0_0 = arith.constant 0 : index
    %0 = vector.load %arg2[%c0, %c0_0] : memref<64x128xf32, #tpu.memory_space<vmem>>, vector<64x128xf32>
    %c0_1 = arith.constant 0 : index
    %c0_2 = arith.constant 0 : index
    %1 = vector.load %arg1[%c0_1, %c0_2] : memref<8x1xi32, #tpu.memory_space<vmem>>, vector<8x1xi32>
    %2 = tpu.iota {dimensions = array<i32: 1>} : vector<8x64xi32>
    %3 = vector.broadcast %1 : vector<8x1xi32> to vector<8x64xi32>
    %4 = arith.cmpi eq, %3, %2 : vector<8x64xi32>
    %5 = arith.extui %4 : vector<8x64xi1> to vector<8x64xi32>
    %6 = arith.sitofp %5 : vector<8x64xi32> to vector<8x64xf32>
    %cst = arith.constant dense<0.000000e+00> : vector<8x128xf32>
    %7 = tpu.matmul %6, %0, %cst {dimension_numbers = #tpu.dot_dimension_numbers<[1], [0], [0], [1], [0, 0, 1, 1], [], []>, precision = #tpu.contract_precision<fp32>} : vector<8x64xf32>, vector<64x128xf32>, vector<8x128xf32> -> vector<8x128xf32>
    %c0_3 = arith.constant 0 : index
    %c0_4 = arith.constant 0 : index
    %8 = vector.load %arg3[%c0_3, %c0_4] : memref<8x128xf32, #tpu.memory_space<vmem>>, vector<8x128xf32>
    tpu.vector_store %arg3[%c0_3, %c0_4], %7 {strides = array<i32>} : memref<8x128xf32, #tpu.memory_space<vmem>>, vector<8x128xf32>,
    return
  }
  func.func @transform_0(%arg0: i32) -> (i32, i32) {
    %c0_i32 = arith.constant 0 : i32
    %c0_i32_0 = arith.constant 0 : i32
    return %arg0, %c0_i32 : i32, i32
  }
  func.func @transform_1(%arg0: i32) -> (i32, i32) {
    %c0_i32 = arith.constant 0 : i32
    %c0_i32_0 = arith.constant 0 : i32
    %c0_i32_1 = arith.constant 0 : i32
    return %c0_i32, %c0_i32_0 : i32, i32
  }
  func.func @transform_2(%arg0: i32) -> (i32, i32) {
    %c0_i32 = arith.constant 0 : i32
    %c0_i32_0 = arith.constant 0 : i32
    return %arg0, %c0_i32 : i32, i32
  }
}

</mosaic_0001>

<llo_original>
// kernel: embedder_forward.1
$region0: #{embedder_forward.1}
  #allocation0 [shape = 'u32[]', space=smem, size = 0x4, offset = 0x4, fixed_abs, tag = 'smem constant byte address 0x4 - core index']
  #allocation1 [shape = 'u32[144,128]{1,0:T(1,128)}', space=vmem, size = 0x12000, scoped, tag = 'internal scratch']
  %s0 = inlined_call_operand.vmem [shape: s32[16,1], index: 0, kind: input, shape index: {}]
  %s1 = inlined_call_operand.hbm [shape: f32[64,128], index: 1, kind: input, shape index: {}]
  %s2 = inlined_call_operand.hbm [shape: f32[16,128], index: 2, kind: output, shape index: {}]
  %s3 = sld [smem:[#allocation0]]
  $region45: #{embedder_forward.1} parent=0
    _
  %s5 = ssub.s32 1, %s3
  %s6 = scalar_select 0, %s5, %s3
  $region1: #{embedder_forward.1} parent=0
    #allocation2 [shape = 'u8[32768]{0}', space=vmem, size = 0x8000, scoped, tag = 'input window, operand 1, single buffered']
    #allocation3 [shape = 's32[2]{0}', space=sflag, size = 0x8, scoped, tag = 'scoped memory for embedder_forward.1']
    #allocation4 [shape = 's32[2]{0}', space=sflag, size = 0x8, scoped, tag = 'scoped memory for embedder_forward.1']
    #allocation5 [shape = 'u8[8192]{0}', space=vmem, size = 0x2000, scoped, tag = 'output window, operand 0']
    %7 = vsyncpa [#allocation3], 0
    %8 = vsyncpa [#allocation4], 0
    %s9 = scalar_lea.sflag [#allocation4], 1
    %10 = vsyncpa %s9, 0
    loop: start=0, step=1, limit=4
    $region2: #{embedder_forward.1} parent=1 // loop_pre_header
      _
    $region3: #{embedder_forward.1} parent=1 // loop_header
      %s12 = sphi 0, %s16
      %p13 = scmp.ge.s32.totalorder %s12, 4
      %s22 = sphi 0, %s24
      %s25 = sphi 0, %s22
      %s26 = sphi 0, %s25
      %s42 = sphi 0, %s26
      %s46 = sphi 0, %s46
      %s48 = sphi 0, %s46
      %s49 = sphi 0, %s48
      %s63 = sphi 0, %s49
      %s69 = sphi 0, %s71
      %s72 = sphi 0, %s69
      %s73 = sphi 0, %s72
      %s89 = sphi 0, %s73
    $region4: #{embedder_forward.1} parent=1 // loop_header_branch
      %15 = sbr.rel (%p13) target = $region8
    $region5: #{embedder_forward.1} parent=1 // loop_body
      %s17 = ssub.s32 %s12, 1
      %s18 = ssub.s32 %s12, 2
      %s19 = sadd.s32 %s12, 1
      %s20 = ssub.s32 %s12, %s19
      %p21 = scmp.eq.s32.totalorder %s20, 0
      %s23 = sadd.s32 %s22, 1
      %s24 = scalar_select %p21, %s22, %s23
      %p27 = pneg %p21
      %p28 = scmp.eq.s32.totalorder %s12, 1
      %p29 = por %p27, %p28
      %p30 = scmp.ne.s32.totalorder %s22, %s25
      %p31 = scmp.eq.s32.totalorder %s12, 0
      %p32 = por %p30, %p31
      %p33 = scmp.ne.s32.totalorder %s22, %s25
      %p34 = scmp.eq.s32.totalorder %s17, 1
      %p35 = por %p33, %p34
      %p36 = scmp.ne.s32.totalorder %s25, %s26
      %p37 = scmp.eq.s32.totalorder %s17, 0
      %p38 = por %p36, %p37
      %p39 = scmp.ne.s32.totalorder %s25, %s26
      %p40 = scmp.eq.s32.totalorder %s18, 1
      %p41 = por %p39, %p40
      %p43 = scmp.ne.s32.totalorder %s26, %s42
      %p44 = scmp.eq.s32.totalorder %s18, 0
      %p45 = por %p43, %p44
      %s47 = sadd.s32 %s46, 1
      %p50 = scmp.eq.s32.totalorder %s12, 1
      %p51 = scmp.ne.s32.totalorder %s46, %s48
      %p52 = scmp.eq.s32.totalorder %s12, 0
      %p53 = por %p51, %p52
      %p54 = scmp.ne.s32.totalorder %s46, %s48
      %p55 = scmp.eq.s32.totalorder %s17, 1
      %p56 = por %p54, %p55
      %p57 = scmp.ne.s32.totalorder %s48, %s49
      %p58 = scmp.eq.s32.totalorder %s17, 0
      %p59 = por %p57, %p58
      %p60 = scmp.ne.s32.totalorder %s48, %s49
      %p61 = scmp.eq.s32.totalorder %s18, 1
      %p62 = por %p60, %p61
      %p64 = scmp.ne.s32.totalorder %s49, %s63
      %p65 = scmp.eq.s32.totalorder %s18, 0
      %p66 = por %p64, %p65
      %s67 = ssub.s32 %s12, %s19
      %p68 = scmp.eq.s32.totalorder %s67, 0
      %s70 = sadd.s32 %s69, 1
      %s71 = scalar_select %p68, %s69, %s70
      %p74 = pneg %p68
      %p75 = scmp.eq.s32.totalorder %s12, 1
      %p76 = por %p74, %p75
      %p77 = scmp.ne.s32.totalorder %s69, %s72
      %p78 = scmp.eq.s32.totalorder %s12, 0
      %p79 = por %p77, %p78
      %p80 = scmp.ne.s32.totalorder %s69, %s72
      %p81 = scmp.eq.s32.totalorder %s17, 1
      %p82 = por %p80, %p81
      %p83 = scmp.ne.s32.totalorder %s72, %s73
      %p84 = scmp.eq.s32.totalorder %s17, 0
      %p85 = por %p83, %p84
      %p86 = scmp.ne.s32.totalorder %s72, %s73
      %p87 = scmp.eq.s32.totalorder %s18, 1
      %p88 = por %p86, %p87
      %p90 = scmp.ne.s32.totalorder %s73, %s89
      %p91 = scmp.eq.s32.totalorder %s18, 0
      %p92 = por %p90, %p91
      %p93 = scmp.le.s32.totalorder 1, %s12
      %p94 = scmp.lt.s32.totalorder %s12, 3
      %p95 = pnand %p93, %p94
      %p96 = pneg %p95
      // Predicated region
      $region9: #{embedder_forward.1} parent=5 // pred_check
        _
      $region10: #{embedder_forward.1} parent=5 // pred_check_branch
        %98 = sbr.rel (%p95) target = $region12
      $region11: #{embedder_forward.1} parent=5 // pred_region
        %s99 = ssub.s32 %s12, 1
        // Predicated region
        $region13: #{embedder_forward.1} parent=11 // pred_check
          %p100 = pneg %p59
        $region14: #{embedder_forward.1} parent=11 // pred_check_branch
          %102 = sbr.rel (%p100) target = $region16
        $region15: #{embedder_forward.1} parent=11 // pred_region
          %s104 = ssub.s32 1024, 1024
          %105 = vsyncadd [#allocation3], %s104
          %s106 = sshll.u32 [#allocation2], 4
          %s107 = int_to_ptr.vmem [resolvable:$true] %s106
          %112 = dma.hbm_to_vmem [thread:$0]  %s1, 1024, %s107, [#allocation3], 128, 128, 8
        $region16: #{embedder_forward.1} parent=11 // pred_fallthru
          _
      $region12: #{embedder_forward.1} parent=5 // pred_fallthru
        _
      %p113 = scmp.lt.s32.totalorder %s12, 2
      // Predicated region
      $region17: #{embedder_forward.1} parent=5 // pred_check
        %p114 = pneg %p113
      $region18: #{embedder_forward.1} parent=5 // pred_check_branch
        %116 = sbr.rel (%p114) target = $region20
      $region19: #{embedder_forward.1} parent=5 // pred_region
        // Predicated region
        $region21: #{embedder_forward.1} parent=19 // pred_check
          %p117 = pneg %p32
        $region22: #{embedder_forward.1} parent=19 // pred_check_branch
          %119 = sbr.rel (%p117) target = $region24
        $region23: #{embedder_forward.1} parent=19 // pred_region
          %p120 = scmp.lt.s32.totalorder %s12, 1
          %s121 = scalar_select %p120, %s12, 1
          %s122 = smul.addr %s121, 8
          %s123 = scalar_lea.vmem %s0, %s122
        $region24: #{embedder_forward.1} parent=19 // pred_fallthru
          _
      $region20: #{embedder_forward.1} parent=5 // pred_fallthru
        _
      %p124 = scmp.le.s32.totalorder 1, %s12
      %p125 = scmp.lt.s32.totalorder %s12, 3
      %p126 = pnand %p124, %p125
      %p127 = pneg %p126
      // Predicated region
      $region25: #{embedder_forward.1} parent=5 // pred_check
        _
      $region26: #{embedder_forward.1} parent=5 // pred_check_branch
        %129 = sbr.rel (%p126) target = $region28
      $region27: #{embedder_forward.1} parent=5 // pred_region
        %s130 = ssub.s32 %s12, 1
        // Predicated region
        $region29: #{embedder_forward.1} parent=27 // pred_check
          %p131 = pneg %p59
        $region30: #{embedder_forward.1} parent=27 // pred_check_branch
          %133 = sbr.rel (%p131) target = $region32
        $region31: #{embedder_forward.1} parent=27 // pred_region
          %134 = dma.done [#allocation3], 1024
        $region32: #{embedder_forward.1} parent=27 // pred_fallthru
          _
        %p135 = scmp.lt.s32.totalorder %s17, 1
        %s136 = scalar_select %p135, %s17, 1
        %s137 = smul.addr %s136, 8
        %s138 = scalar_lea.vmem %s0, %s137
        %p139 = pneg %p38
        %p140 = pneg %p35
        %p141 = pneg %p59
        %p142 = pneg %p56
        %p143 = pneg %p85
        %p144 = pneg %p82
        %s145 = sand.u32 %s72, 1
        %s146 = scalar_lea.sflag [#allocation4], %s145
        %s147 = sand.u32 %s72, 1
        %s148 = smul.addr %s147, 8
        %s149 = scalar_lea.vmem [#allocation5], %s148
        %p150 = scmp.lt.s32.totalorder %s17, 1
        %s151 = scalar_select %p150, %s17, 1
        %s152 = smul.addr %s151, 8
        %s153 = scalar_lea.vmem %s0, %s152
        %v154 = vld [vmem:[#allocation2] sm:$0xff]
        %v155 = vld [vmem:[#allocation2 + $0x8] sm:$0xff]
        %v156 = vld [vmem:[#allocation2 + $0x10] sm:$0xff]
        %v157 = vld [vmem:[#allocation2 + $0x18] sm:$0xff]
        %v158 = vld [vmem:[#allocation2 + $0x20] sm:$0xff]
        %v159 = vld [vmem:[#allocation2 + $0x28] sm:$0xff]
        %v160 = vld [vmem:[#allocation2 + $0x30] sm:$0xff]
        %v161 = vld [vmem:[#allocation2 + $0x38] sm:$0xff]
        %v162 = vld [vmem:[%s153] sm:$0xff]
        %v163 = vlaneseq
        %v164 = vand.u32 %v163, 127
        %165 = vset.pattern.permute.xlu0 0
        %166 = vperm.xlu0 %165, %v162
        %v167 = vpop.permute.xlu0 %166
        %vm168 = vcmp.eq.s32.totalorder %v167, %v164
        %v169 = vsel %vm168, 1, 0
        %v170 = vcvt.s32.f32 %v169
        %vm171 = vcmask 523264
        %v173 = vsel %vm171, %v170, 0
        %175 = vmatprep.subr.mxu0 0.0
        %v176 = vand.u32 %v154, 4294901760
        %177 = vmatpush1.msra.mxu0 %v176
        %178 = vmatprep.subr.mxu0 0.0
        %v179 = vand.u32 %v155, 4294901760
        %180 = vmatpush1.msra.mxu0 %v179
        %181 = vmatprep.subr.mxu0 0.0
        %v182 = vand.u32 %v156, 4294901760
        %183 = vmatpush1.msra.mxu0 %v182
        %184 = vmatprep.subr.mxu0 0.0
        %v185 = vand.u32 %v157, 4294901760
        %186 = vmatpush1.msra.mxu0 %v185
        %187 = vmatprep.subr.mxu0 0.0
        %v188 = vand.u32 %v158, 4294901760
        %189 = vmatpush1.msra.mxu0 %v188
        %190 = vmatprep.subr.mxu0 0.0
        %v191 = vand.u32 %v159, 4294901760
        %192 = vmatpush1.msra.mxu0 %v191
        %193 = vmatprep.subr.mxu0 0.0
        %v194 = vand.u32 %v160, 4294901760
        %195 = vmatpush1.msra.mxu0 %v194
        %196 = vmatprep.subr.mxu0 0.0
        %v197 = vand.u32 %v161, 4294901760
        %198 = vmatpush1.msra.mxu0 %v197
        %199 = vmatprep.subr.mxu0 0.0
        %200 = vmatpush1.msra.mxu0 0.0
        %201 = vmatprep.subr.mxu0 0.0
        %202 = vmatpush1.msra.mxu0 0.0
        %203 = vmatprep.subr.mxu0 0.0
        %204 = vmatpush1.msra.mxu0 0.0
        %205 = vmatprep.subr.mxu0 0.0
        %206 = vmatpush1.msra.mxu0 0.0
        %207 = vmatprep.subr.mxu0 0.0
        %208 = vmatpush1.msra.mxu0 0.0
        %209 = vmatprep.subr.mxu0 0.0
        %210 = vmatpush1.msra.mxu0 0.0
        %211 = vmatprep.subr.mxu0 0.0
        %212 = vmatpush1.msra.mxu0 0.0
        %213 = vmatprep.subr.mxu0 0.0
        %214 = vmatpush1.msra.mxu0 0.0
        %215 = vmatprep.subr.mxu0 0.0
        %216 = vmatpush1.msra.mxu0 0.0
        %217 = vmatprep.subr.mxu0 0.0
        %218 = vmatpush1.msra.mxu0 0.0
        %219 = vmatprep.subr.mxu0 0.0
        %220 = vmatpush1.msra.mxu0 0.0
        %221 = vmatprep.subr.mxu0 0.0
        %222 = vmatpush1.msra.mxu0 0.0
        %223 = vmatprep.subr.mxu0 0.0
        %224 = vmatpush1.msra.mxu0 0.0
        %225 = vmatprep.subr.mxu0 0.0
        %226 = vmatpush1.msra.mxu0 0.0
        %227 = vmatprep.subr.mxu0 0.0
        %228 = vmatpush1.msra.mxu0 0.0
        %229 = vmatprep.subr.mxu0 0.0
        %230 = vmatpush1.msra.mxu0 0.0
        %231 = vmatprep.subr.mxu0 0.0
        %232 = vmatpush1.msra.mxu0 0.0
        %233 = vmatprep.subr.mxu0 0.0
        %234 = vmatpush1.msra.mxu0 0.0
        %235 = vmatprep.subr.mxu0 0.0
        %236 = vmatpush1.msra.mxu0 0.0
        %237 = vmatprep.subr.mxu0 0.0
        %238 = vmatpush1.msra.mxu0 0.0
        %239 = vmatprep.subr.mxu0 0.0
        %240 = vmatpush1.msra.mxu0 0.0
        %241 = vmatprep.subr.mxu0 0.0
        %242 = vmatpush1.msra.mxu0 0.0
        %243 = vmatprep.subr.mxu0 0.0
        %244 = vmatpush1.msra.mxu0 0.0
        %245 = vmatprep.subr.mxu0 0.0
        %246 = vmatpush1.msra.mxu0 0.0
        %247 = vmatprep.mubr.f32.mxu0 0.0
        %v248 = vand.u32 %v173, 4294901760
        %v249 = vsub.f32 %v173, %v248
        %v250 = vand.u32 %v249, 4294901760
        %v251 = vsub.f32 %v249, %v250
        %v252 = vand.u32 %v251, 4294901760
        %253 = vmatmul.mubr.f32.gmra.mrb[0].mxu0 %v252
        %v254 = vpop.f32.mrb[0].mxu0
        %v255 = vadd.f32 0.0, %v254
        %v256 = vpop.f32.mrb[0].mxu0
        %257 = vdwg.mxu0
        %258 = vmatprep.subr.mxu0 0.0
        %v259 = vand.u32 %v154, 4294901760
        %v260 = vsub.f32 %v154, %v259
        %v261 = vand.u32 %v260, 4294901760
        %v262 = vsub.f32 %v260, %v261
        %v263 = vand.u32 %v262, 4294901760
        %264 = vmatpush1.msra.mxu0 %v263
        %265 = vmatprep.subr.mxu0 0.0
        %v266 = vand.u32 %v155, 4294901760
        %v267 = vsub.f32 %v155, %v266
        %v268 = vand.u32 %v267, 4294901760
        %v269 = vsub.f32 %v267, %v268
        %v270 = vand.u32 %v269, 4294901760
        %271 = vmatpush1.msra.mxu0 %v270
        %272 = vmatprep.subr.mxu0 0.0
        %v273 = vand.u32 %v156, 4294901760
        %v274 = vsub.f32 %v156, %v273
        %v275 = vand.u32 %v274, 4294901760
        %v276 = vsub.f32 %v274, %v275
        %v277 = vand.u32 %v276, 4294901760
        %278 = vmatpush1.msra.mxu0 %v277
        %279 = vmatprep.subr.mxu0 0.0
        %v280 = vand.u32 %v157, 4294901760
        %v281 = vsub.f32 %v157, %v280
        %v282 = vand.u32 %v281, 4294901760
        %v283 = vsub.f32 %v281, %v282
        %v284 = vand.u32 %v283, 4294901760
        %285 = vmatpush1.msra.mxu0 %v284
        %286 = vmatprep.subr.mxu0 0.0
        %v287 = vand.u32 %v158, 4294901760
        %v288 = vsub.f32 %v158, %v287
        %v289 = vand.u32 %v288, 4294901760
        %v290 = vsub.f32 %v288, %v289
        %v291 = vand.u32 %v290, 4294901760
        %292 = vmatpush1.msra.mxu0 %v291
        %293 = vmatprep.subr.mxu0 0.0
        %v294 = vand.u32 %v159, 4294901760
        %v295 = vsub.f32 %v159, %v294
        %v296 = vand.u32 %v295, 4294901760
        %v297 = vsub.f32 %v295, %v296
        %v298 = vand.u32 %v297, 4294901760
        %299 = vmatpush1.msra.mxu0 %v298
        %300 = vmatprep.subr.mxu0 0.0
        %v301 = vand.u32 %v160, 4294901760
        %v302 = vsub.f32 %v160, %v301
        %v303 = vand.u32 %v302, 4294901760
        %v304 = vsub.f32 %v302, %v303
        %v305 = vand.u32 %v304, 4294901760
        %306 = vmatpush1.msra.mxu0 %v305
        %307 = vmatprep.subr.mxu0 0.0
        %v308 = vand.u32 %v161, 4294901760
        %v309 = vsub.f32 %v161, %v308
        %v310 = vand.u32 %v309, 4294901760
        %v311 = vsub.f32 %v309, %v310
        %v312 = vand.u32 %v311, 4294901760
        %313 = vmatpush1.msra.mxu0 %v312
        %314 = vmatprep.subr.mxu0 0.0
        %315 = vmatpush1.msra.mxu0 0.0
        %316 = vmatprep.subr.mxu0 0.0
        %317 = vmatpush1.msra.mxu0 0.0
        %318 = vmatprep.subr.mxu0 0.0
        %319 = vmatpush1.msra.mxu0 0.0
        %320 = vmatprep.subr.mxu0 0.0
        %321 = vmatpush1.msra.mxu0 0.0
        %322 = vmatprep.subr.mxu0 0.0
        %323 = vmatpush1.msra.mxu0 0.0
        %324 = vmatprep.subr.mxu0 0.0
        %325 = vmatpush1.msra.mxu0 0.0
        %326 = vmatprep.subr.mxu0 0.0
        %327 = vmatpush1.msra.mxu0 0.0
        %328 = vmatprep.subr.mxu0 0.0
        %329 = vmatpush1.msra.mxu0 0.0
        %330 = vmatprep.subr.mxu0 0.0
        %331 = vmatpush1.msra.mxu0 0.0
        %332 = vmatprep.subr.mxu0 0.0
        %333 = vmatpush1.msra.mxu0 0.0
        %334 = vmatprep.subr.mxu0 0.0
        %335 = vmatpush1.msra.mxu0 0.0
        %336 = vmatprep.subr.mxu0 0.0
        %337 = vmatpush1.msra.mxu0 0.0
        %338 = vmatprep.subr.mxu0 0.0
        %339 = vmatpush1.msra.mxu0 0.0
        %340 = vmatprep.subr.mxu0 0.0
        %341 = vmatpush1.msra.mxu0 0.0
        %342 = vmatprep.subr.mxu0 0.0
        %343 = vmatpush1.msra.mxu0 0.0
        %344 = vmatprep.subr.mxu0 0.0
        %345 = vmatpush1.msra.mxu0 0.0
        %346 = vmatprep.subr.mxu0 0.0
        %347 = vmatpush1.msra.mxu0 0.0
        %348 = vmatprep.subr.mxu0 0.0
        %349 = vmatpush1.msra.mxu0 0.0
        %350 = vmatprep.subr.mxu0 0.0
        %351 = vmatpush1.msra.mxu0 0.0
        %352 = vmatprep.subr.mxu0 0.0
        %353 = vmatpush1.msra.mxu0 0.0
        %354 = vmatprep.subr.mxu0 0.0
        %355 = vmatpush1.msra.mxu0 0.0
        %356 = vmatprep.subr.mxu0 0.0
        %357 = vmatpush1.msra.mxu0 0.0
        %358 = vmatprep.subr.mxu0 0.0
        %359 = vmatpush1.msra.mxu0 0.0
        %360 = vmatprep.subr.mxu0 0.0
        %361 = vmatpush1.msra.mxu0 0.0
        %362 = vmatprep.mubr.f32.mxu0 0.0
        %v363 = vand.u32 %v173, 4294901760
        %364 = vmatmul.mubr.f32.gmra.mrb[0].mxu0 %v363
        %v365 = vpop.f32.mrb[0].mxu0
        %v366 = vadd.f32 %v255, %v365
        %v367 = vpop.f32.mrb[0].mxu0
        %368 = vdwg.mxu0
        %369 = vmatprep.subr.mxu0 0.0
        %v370 = vand.u32 %v154, 4294901760
        %v371 = vsub.f32 %v154, %v370
        %372 = vmatpush1.msra.mxu0 %v371
        %373 = vmatprep.subr.mxu0 0.0
        %v374 = vand.u32 %v155, 4294901760
        %v375 = vsub.f32 %v155, %v374
        %376 = vmatpush1.msra.mxu0 %v375
        %377 = vmatprep.subr.mxu0 0.0
        %v378 = vand.u32 %v156, 4294901760
        %v379 = vsub.f32 %v156, %v378
        %380 = vmatpush1.msra.mxu0 %v379
        %381 = vmatprep.subr.mxu0 0.0
        %v382 = vand.u32 %v157, 4294901760
        %v383 = vsub.f32 %v157, %v382
        %384 = vmatpush1.msra.mxu0 %v383
        %385 = vmatprep.subr.mxu0 0.0
        %v386 = vand.u32 %v158, 4294901760
        %v387 = vsub.f32 %v158, %v386
        %388 = vmatpush1.msra.mxu0 %v387
        %389 = vmatprep.subr.mxu0 0.0
        %v390 = vand.u32 %v159, 4294901760
        %v391 = vsub.f32 %v159, %v390
        %392 = vmatpush1.msra.mxu0 %v391
        %393 = vmatprep.subr.mxu0 0.0
        %v394 = vand.u32 %v160, 4294901760
        %v395 = vsub.f32 %v160, %v394
        %396 = vmatpush1.msra.mxu0 %v395
        %397 = vmatprep.subr.mxu0 0.0
        %v398 = vand.u32 %v161, 4294901760
        %v399 = vsub.f32 %v161, %v398
        %400 = vmatpush1.msra.mxu0 %v399
        %401 = vmatprep.subr.mxu0 0.0
        %402 = vmatpush1.msra.mxu0 0.0
        %403 = vmatprep.subr.mxu0 0.0
        %404 = vmatpush1.msra.mxu0 0.0
        %405 = vmatprep.subr.mxu0 0.0
        %406 = vmatpush1.msra.mxu0 0.0
        %407 = vmatprep.subr.mxu0 0.0
        %408 = vmatpush1.msra.mxu0 0.0
        %409 = vmatprep.subr.mxu0 0.0
        %410 = vmatpush1.msra.mxu0 0.0
        %411 = vmatprep.subr.mxu0 0.0
        %412 = vmatpush1.msra.mxu0 0.0
        %413 = vmatprep.subr.mxu0 0.0
        %414 = vmatpush1.msra.mxu0 0.0
        %415 = vmatprep.subr.mxu0 0.0
        %416 = vmatpush1.msra.mxu0 0.0
        %417 = vmatprep.subr.mxu0 0.0
        %418 = vmatpush1.msra.mxu0 0.0
        %419 = vmatprep.subr.mxu0 0.0
        %420 = vmatpush1.msra.mxu0 0.0
        %421 = vmatprep.subr.mxu0 0.0
        %422 = vmatpush1.msra.mxu0 0.0
        %423 = vmatprep.subr.mxu0 0.0
        %424 = vmatpush1.msra.mxu0 0.0
        %425 = vmatprep.subr.mxu0 0.0
        %426 = vmatpush1.msra.mxu0 0.0
        %427 = vmatprep.subr.mxu0 0.0
        %428 = vmatpush1.msra.mxu0 0.0
        %429 = vmatprep.subr.mxu0 0.0
        %430 = vmatpush1.msra.mxu0 0.0
        %431 = vmatprep.subr.mxu0 0.0
        %432 = vmatpush1.msra.mxu0 0.0
        %433 = vmatprep.subr.mxu0 0.0
        %434 = vmatpush1.msra.mxu0 0.0
        %435 = vmatprep.subr.mxu0 0.0
        %436 = vmatpush1.msra.mxu0 0.0
        %437 = vmatprep.subr.mxu0 0.0
        %438 = vmatpush1.msra.mxu0 0.0
        %439 = vmatprep.subr.mxu0 0.0
        %440 = vmatpush1.msra.mxu0 0.0
        %441 = vmatprep.subr.mxu0 0.0
        %442 = vmatpush1.msra.mxu0 0.0
        %443 = vmatprep.subr.mxu0 0.0
        %444 = vmatpush1.msra.mxu0 0.0
        %445 = vmatprep.subr.mxu0 0.0
        %446 = vmatpush1.msra.mxu0 0.0
        %447 = vmatprep.subr.mxu0 0.0
        %448 = vmatpush1.msra.mxu0 0.0
        %449 = vmatprep.mubr.f32.mxu0 0.0
        %v450 = vand.u32 %v173, 4294901760
        %v451 = vsub.f32 %v173, %v450
        %452 = vmatmul.mubr.f32.gmra.mrb[0].mxu0 %v451
        %v453 = vpop.f32.mrb[0].mxu0
        %v454 = vadd.f32 %v366, %v453
        %v455 = vpop.f32.mrb[0].mxu0
        %456 = vdwg.mxu0
        %457 = vmatprep.subr.mxu0 0.0
        %v458 = vand.u32 %v154, 4294901760
        %459 = vmatpush1.msra.mxu0 %v458
        %460 = vmatprep.subr.mxu0 0.0
        %v461 = vand.u32 %v155, 4294901760
        %462 = vmatpush1.msra.mxu0 %v461
        %463 = vmatprep.subr.mxu0 0.0
        %v464 = vand.u32 %v156, 4294901760
        %465 = vmatpush1.msra.mxu0 %v464
        %466 = vmatprep.subr.mxu0 0.0
        %v467 = vand.u32 %v157, 4294901760
        %468 = vmatpush1.msra.mxu0 %v467
        %469 = vmatprep.subr.mxu0 0.0
        %v470 = vand.u32 %v158, 4294901760
        %471 = vmatpush1.msra.mxu0 %v470
        %472 = vmatprep.subr.mxu0 0.0
        %v473 = vand.u32 %v159, 4294901760
        %474 = vmatpush1.msra.mxu0 %v473
        %475 = vmatprep.subr.mxu0 0.0
        %v476 = vand.u32 %v160, 4294901760
        %477 = vmatpush1.msra.mxu0 %v476
        %478 = vmatprep.subr.mxu0 0.0
        %v479 = vand.u32 %v161, 4294901760
        %480 = vmatpush1.msra.mxu0 %v479
        %481 = vmatprep.subr.mxu0 0.0
        %482 = vmatpush1.msra.mxu0 0.0
        %483 = vmatprep.subr.mxu0 0.0
        %484 = vmatpush1.msra.mxu0 0.0
        %485 = vmatprep.subr.mxu0 0.0
        %486 = vmatpush1.msra.mxu0 0.0
        %487 = vmatprep.subr.mxu0 0.0
        %488 = vmatpush1.msra.mxu0 0.0
        %489 = vmatprep.subr.mxu0 0.0
        %490 = vmatpush1.msra.mxu0 0.0
        %491 = vmatprep.subr.mxu0 0.0
        %492 = vmatpush1.msra.mxu0 0.0
        %493 = vmatprep.subr.mxu0 0.0
        %494 = vmatpush1.msra.mxu0 0.0
        %495 = vmatprep.subr.mxu0 0.0
        %496 = vmatpush1.msra.mxu0 0.0
        %497 = vmatprep.subr.mxu0 0.0
        %498 = vmatpush1.msra.mxu0 0.0
        %499 = vmatprep.subr.mxu0 0.0
        %500 = vmatpush1.msra.mxu0 0.0
        %501 = vmatprep.subr.mxu0 0.0
        %502 = vmatpush1.msra.mxu0 0.0
        %503 = vmatprep.subr.mxu0 0.0
        %504 = vmatpush1.msra.mxu0 0.0
        %505 = vmatprep.subr.mxu0 0.0
        %506 = vmatpush1.msra.mxu0 0.0
        %507 = vmatprep.subr.mxu0 0.0
        %508 = vmatpush1.msra.mxu0 0.0
        %509 = vmatprep.subr.mxu0 0.0
        %510 = vmatpush1.msra.mxu0 0.0
        %511 = vmatprep.subr.mxu0 0.0
        %512 = vmatpush1.msra.mxu0 0.0
        %513 = vmatprep.subr.mxu0 0.0
        %514 = vmatpush1.msra.mxu0 0.0
        %515 = vmatprep.subr.mxu0 0.0
        %516 = vmatpush1.msra.mxu0 0.0
        %517 = vmatprep.subr.mxu0 0.0
        %518 = vmatpush1.msra.mxu0 0.0
        %519 = vmatprep.subr.mxu0 0.0
        %520 = vmatpush1.msra.mxu0 0.0
        %521 = vmatprep.subr.mxu0 0.0
        %522 = vmatpush1.msra.mxu0 0.0
        %523 = vmatprep.subr.mxu0 0.0
        %524 = vmatpush1.msra.mxu0 0.0
        %525 = vmatprep.subr.mxu0 0.0
        %526 = vmatpush1.msra.mxu0 0.0
        %527 = vmatprep.subr.mxu0 0.0
        %528 = vmatpush1.msra.mxu0 0.0
        %529 = vmatprep.mubr.f32.mxu0 0.0
        %v530 = vand.u32 %v173, 4294901760
        %v531 = vsub.f32 %v173, %v530
        %v532 = vand.u32 %v531, 4294901760
        %533 = vmatmul.mubr.f32.gmra.mrb[0].mxu0 %v532
        %v534 = vpop.f32.mrb[0].mxu0
        %v535 = vadd.f32 %v454, %v534
        %v536 = vpop.f32.mrb[0].mxu0
        %537 = vdwg.mxu0
        %538 = vmatprep.subr.mxu0 0.0
        %v539 = vand.u32 %v154, 4294901760
        %v540 = vsub.f32 %v154, %v539
        %v541 = vand.u32 %v540, 4294901760
        %542 = vmatpush1.msra.mxu0 %v541
        %543 = vmatprep.subr.mxu0 0.0
        %v544 = vand.u32 %v155, 4294901760
        %v545 = vsub.f32 %v155, %v544
        %v546 = vand.u32 %v545, 4294901760
        %547 = vmatpush1.msra.mxu0 %v546
        %548 = vmatprep.subr.mxu0 0.0
        %v549 = vand.u32 %v156, 4294901760
        %v550 = vsub.f32 %v156, %v549
        %v551 = vand.u32 %v550, 4294901760
        %552 = vmatpush1.msra.mxu0 %v551
        %553 = vmatprep.subr.mxu0 0.0
        %v554 = vand.u32 %v157, 4294901760
        %v555 = vsub.f32 %v157, %v554
        %v556 = vand.u32 %v555, 4294901760
        %557 = vmatpush1.msra.mxu0 %v556
        %558 = vmatprep.subr.mxu0 0.0
        %v559 = vand.u32 %v158, 4294901760
        %v560 = vsub.f32 %v158, %v559
        %v561 = vand.u32 %v560, 4294901760
        %562 = vmatpush1.msra.mxu0 %v561
        %563 = vmatprep.subr.mxu0 0.0
        %v564 = vand.u32 %v159, 4294901760
        %v565 = vsub.f32 %v159, %v564
        %v566 = vand.u32 %v565, 4294901760
        %567 = vmatpush1.msra.mxu0 %v566
        %568 = vmatprep.subr.mxu0 0.0
        %v569 = vand.u32 %v160, 4294901760
        %v570 = vsub.f32 %v160, %v569
        %v571 = vand.u32 %v570, 4294901760
        %572 = vmatpush1.msra.mxu0 %v571
        %573 = vmatprep.subr.mxu0 0.0
        %v574 = vand.u32 %v161, 4294901760
        %v575 = vsub.f32 %v161, %v574
        %v576 = vand.u32 %v575, 4294901760
        %577 = vmatpush1.msra.mxu0 %v576
        %578 = vmatprep.subr.mxu0 0.0
        %579 = vmatpush1.msra.mxu0 0.0
        %580 = vmatprep.subr.mxu0 0.0
        %581 = vmatpush1.msra.mxu0 0.0
        %582 = vmatprep.subr.mxu0 0.0
        %583 = vmatpush1.msra.mxu0 0.0
        %584 = vmatprep.subr.mxu0 0.0
        %585 = vmatpush1.msra.mxu0 0.0
        %586 = vmatprep.subr.mxu0 0.0
        %587 = vmatpush1.msra.mxu0 0.0
        %588 = vmatprep.subr.mxu0 0.0
        %589 = vmatpush1.msra.mxu0 0.0
        %590 = vmatprep.subr.mxu0 0.0
        %591 = vmatpush1.msra.mxu0 0.0
        %592 = vmatprep.subr.mxu0 0.0
        %593 = vmatpush1.msra.mxu0 0.0
        %594 = vmatprep.subr.mxu0 0.0
        %595 = vmatpush1.msra.mxu0 0.0
        %596 = vmatprep.subr.mxu0 0.0
        %597 = vmatpush1.msra.mxu0 0.0
        %598 = vmatprep.subr.mxu0 0.0
        %599 = vmatpush1.msra.mxu0 0.0
        %600 = vmatprep.subr.mxu0 0.0
        %601 = vmatpush1.msra.mxu0 0.0
        %602 = vmatprep.subr.mxu0 0.0
        %603 = vmatpush1.msra.mxu0 0.0
        %604 = vmatprep.subr.mxu0 0.0
        %605 = vmatpush1.msra.mxu0 0.0
        %606 = vmatprep.subr.mxu0 0.0
        %607 = vmatpush1.msra.mxu0 0.0
        %608 = vmatprep.subr.mxu0 0.0
        %609 = vmatpush1.msra.mxu0 0.0
        %610 = vmatprep.subr.mxu0 0.0
        %611 = vmatpush1.msra.mxu0 0.0
        %612 = vmatprep.subr.mxu0 0.0
        %613 = vmatpush1.msra.mxu0 0.0
        %614 = vmatprep.subr.mxu0 0.0
        %615 = vmatpush1.msra.mxu0 0.0
        %616 = vmatprep.subr.mxu0 0.0
        %617 = vmatpush1.msra.mxu0 0.0
        %618 = vmatprep.subr.mxu0 0.0
        %619 = vmatpush1.msra.mxu0 0.0
        %620 = vmatprep.subr.mxu0 0.0
        %621 = vmatpush1.msra.mxu0 0.0
        %622 = vmatprep.subr.mxu0 0.0
        %623 = vmatpush1.msra.mxu0 0.0
        %624 = vmatprep.subr.mxu0 0.0
        %625 = vmatpush1.msra.mxu0 0.0
        %626 = vmatprep.mubr.f32.mxu0 0.0
        %v627 = vand.u32 %v173, 4294901760
        %628 = vmatmul.mubr.f32.gmra.mrb[0].mxu0 %v627
        %v629 = vpop.f32.mrb[0].mxu0
        %v630 = vadd.f32 %v535, %v629
        %v631 = vpop.f32.mrb[0].mxu0
        %632 = vdwg.mxu0
        %633 = vmatprep.subr.mxu0 0.0
        %v634 = vand.u32 %v154, 4294901760
        %635 = vmatpush1.msra.mxu0 %v634
        %636 = vmatprep.subr.mxu0 0.0
        %v637 = vand.u32 %v155, 4294901760
        %638 = vmatpush1.msra.mxu0 %v637
        %639 = vmatprep.subr.mxu0 0.0
        %v640 = vand.u32 %v156, 4294901760
        %641 = vmatpush1.msra.mxu0 %v640
        %642 = vmatprep.subr.mxu0 0.0
        %v643 = vand.u32 %v157, 4294901760
        %644 = vmatpush1.msra.mxu0 %v643
        %645 = vmatprep.subr.mxu0 0.0
        %v646 = vand.u32 %v158, 4294901760
        %647 = vmatpush1.msra.mxu0 %v646
        %648 = vmatprep.subr.mxu0 0.0
        %v649 = vand.u32 %v159, 4294901760
        %650 = vmatpush1.msra.mxu0 %v649
        %651 = vmatprep.subr.mxu0 0.0
        %v652 = vand.u32 %v160, 4294901760
        %653 = vmatpush1.msra.mxu0 %v652
        %654 = vmatprep.subr.mxu0 0.0
        %v655 = vand.u32 %v161, 4294901760
        %656 = vmatpush1.msra.mxu0 %v655
        %657 = vmatprep.subr.mxu0 0.0
        %658 = vmatpush1.msra.mxu0 0.0
        %659 = vmatprep.subr.mxu0 0.0
        %660 = vmatpush1.msra.mxu0 0.0
        %661 = vmatprep.subr.mxu0 0.0
        %662 = vmatpush1.msra.mxu0 0.0
        %663 = vmatprep.subr.mxu0 0.0
        %664 = vmatpush1.msra.mxu0 0.0
        %665 = vmatprep.subr.mxu0 0.0
        %666 = vmatpush1.msra.mxu0 0.0
        %667 = vmatprep.subr.mxu0 0.0
        %668 = vmatpush1.msra.mxu0 0.0
        %669 = vmatprep.subr.mxu0 0.0
        %670 = vmatpush1.msra.mxu0 0.0
        %671 = vmatprep.subr.mxu0 0.0
        %672 = vmatpush1.msra.mxu0 0.0
        %673 = vmatprep.subr.mxu0 0.0
        %674 = vmatpush1.msra.mxu0 0.0
        %675 = vmatprep.subr.mxu0 0.0
        %676 = vmatpush1.msra.mxu0 0.0
        %677 = vmatprep.subr.mxu0 0.0
        %678 = vmatpush1.msra.mxu0 0.0
        %679 = vmatprep.subr.mxu0 0.0
        %680 = vmatpush1.msra.mxu0 0.0
        %681 = vmatprep.subr.mxu0 0.0
        %682 = vmatpush1.msra.mxu0 0.0
        %683 = vmatprep.subr.mxu0 0.0
        %684 = vmatpush1.msra.mxu0 0.0
        %685 = vmatprep.subr.mxu0 0.0
        %686 = vmatpush1.msra.mxu0 0.0
        %687 = vmatprep.subr.mxu0 0.0
        %688 = vmatpush1.msra.mxu0 0.0
        %689 = vmatprep.subr.mxu0 0.0
        %690 = vmatpush1.msra.mxu0 0.0
        %691 = vmatprep.subr.mxu0 0.0
        %692 = vmatpush1.msra.mxu0 0.0
        %693 = vmatprep.subr.mxu0 0.0
        %694 = vmatpush1.msra.mxu0 0.0
        %695 = vmatprep.subr.mxu0 0.0
        %696 = vmatpush1.msra.mxu0 0.0
        %697 = vmatprep.subr.mxu0 0.0
        %698 = vmatpush1.msra.mxu0 0.0
        %699 = vmatprep.subr.mxu0 0.0
        %700 = vmatpush1.msra.mxu0 0.0
        %701 = vmatprep.subr.mxu0 0.0
        %702 = vmatpush1.msra.mxu0 0.0
        %703 = vmatprep.subr.mxu0 0.0
        %704 = vmatpush1.msra.mxu0 0.0
        %705 = vmatprep.mubr.f32.mxu0 0.0
        %v706 = vand.u32 %v173, 4294901760
        %707 = vmatmul.mubr.f32.gmra.mrb[0].mxu0 %v706
        %v708 = vpop.f32.mrb[0].mxu0
        %v709 = vadd.f32 %v630, %v708
        %v710 = vpop.f32.mrb[0].mxu0
        %711 = vdwg.mxu0
        %712 = vst [vmem:[%s149] sm:$0xff] %v709
        %s713 = sand.u32 %s72, 1
        %s714 = scalar_lea.sflag [#allocation4], %s713
        %s715 = sand.u32 %s72, 1
        %s716 = smul.addr %s715, 8
        %s717 = scalar_lea.vmem [#allocation5], %s716
        // Predicated region
        $region33: #{embedder_forward.1} parent=27 // pred_check
          %p718 = pneg %p82
        $region34: #{embedder_forward.1} parent=27 // pred_check_branch
          %720 = sbr.rel (%p718) target = $region36
        $region35: #{embedder_forward.1} parent=27 // pred_region
          %s722 = ssub.s32 128, 128
          %723 = vsyncadd %s714, %s722
          %s724 = smul.addr %s17, 128
          %s725 = scalar_lea.hbm %s2, %s724
          %s727 = sshll.u32 %s717, 4
          %s728 = int_to_ptr.vmem [resolvable:$true] %s727
          %730 = dma.vmem_to_hbm [thread:$0]  %s728, 128, %s725, %s714
        $region36: #{embedder_forward.1} parent=27 // pred_fallthru
          _
      $region28: #{embedder_forward.1} parent=5 // pred_fallthru
        _
      %p731 = scmp.le.s32.totalorder 2, %s12
      // Predicated region
      $region37: #{embedder_forward.1} parent=5 // pred_check
        %p732 = pneg %p731
      $region38: #{embedder_forward.1} parent=5 // pred_check_branch
        %734 = sbr.rel (%p732) target = $region40
      $region39: #{embedder_forward.1} parent=5 // pred_region
        %s735 = ssub.s32 %s12, 2
        // Predicated region
        $region41: #{embedder_forward.1} parent=39 // pred_check
          %p736 = pneg %p88
        $region42: #{embedder_forward.1} parent=39 // pred_check_branch
          %738 = sbr.rel (%p736) target = $region44
        $region43: #{embedder_forward.1} parent=39 // pred_region
          %s739 = sand.u32 %s73, 1
          %s740 = scalar_lea.sflag [#allocation4], %s739
          %s741 = sand.u32 %s73, 1
          %s742 = smul.addr %s741, 8
          %s743 = scalar_lea.vmem [#allocation5], %s742
          %744 = dma.done %s740, 128
        $region44: #{embedder_forward.1} parent=39 // pred_fallthru
          _
      $region40: #{embedder_forward.1} parent=5 // pred_fallthru
        _
    $region6: #{embedder_forward.1} parent=1 // loop_footer
      %s16 = sadd.s32 1, %s12
    $region7: #{embedder_forward.1} parent=1 // loop_footer_branch
      %11 = sbr.rel target = $region3
    $region8: #{embedder_forward.1} parent=1 // loop_exit
      _
    %745 = vsyncpa [#allocation3], 1
    %s746 = scalar_lea.sflag [#allocation3], 1
    %747 = vsyncpa %s746, 1
    %748 = vsyncpa [#allocation4], 1
    %s749 = scalar_lea.sflag [#allocation4], 1
    %750 = vsyncpa %s749, 1

</llo_original>
